<compile_context>
chip_gen: v6e
topology: v6e:2x2x1
jax: 0.10.0
libtpu: 0.0.40
codegen_flags: <defaults>
</compile_context>

<pallas_src>
import functools

import jax
import jax.numpy as jnp
from jax.experimental import pallas as pl
from jax.experimental.pallas import tpu as pltpu


def _policy_kernel(x_ref, w1_ref, w2_ref, w3_ref, b_ref, *rest,
                   h1_size, h2_size, a_size):
    """Fused Policy forward for one batch tile."""
    if len(rest) == 2:          # training: dropout mask is an extra streamed input
        mask_ref, out_ref = rest
    else:                       # eval: no mask input at all
        mask_ref = None
        (out_ref,) = rest

    x = x_ref[...]

    # Biases are packed row-wise into a single (3, Hmax) resident buffer.
    b1 = b_ref[0:1, :h1_size]
    b2 = b_ref[1:2, :h2_size]
    b3 = b_ref[2:3, :a_size]

    # affine1 (+ dropout) + relu  -- same op order as the PyTorch module.
    h1 = jnp.dot(x, w1_ref[...], preferred_element_type=jnp.float32) + b1
    if mask_ref is not None:
        h1 = h1 * mask_ref[...]          # mask already scaled by 1/(1-p)
    h1 = jnp.maximum(h1, 0.0)

    # affine2 + relu
    h2 = jnp.maximum(
        jnp.dot(h1, w2_ref[...], preferred_element_type=jnp.float32) + b2, 0.0)

    # affine3
    logits = jnp.dot(h2, w3_ref[...], preferred_element_type=jnp.float32) + b3

    # softmax over the action axis (dim=1): one reciprocal per row, then bcast-mul.
    m = jnp.max(logits, axis=1, keepdims=True)
    e = jnp.exp(logits - m)
    inv = 1.0 / jnp.sum(e, axis=1, keepdims=True)
    out_ref[...] = e * inv


def _dropout_mask(rng, shape, drop_p):
    """Pre-scaled keep mask matching torch.nn.Dropout training semantics."""
    keep = jax.random.uniform(rng, shape, jnp.float32) >= jnp.float32(drop_p)
    return keep.astype(jnp.float32) * (1.0 / (1.0 - drop_p))


def policy_forward(params, x, *, training=False, drop_p=0.6, rng=None, block_b=128):
    """Policy forward pass as a single fused Pallas TPU kernel.

    Note: `training`/`drop_p` are compile-time (toggling recompiles); pass a fresh
    `rng` per training-mode call so dropout masks differ between steps.
    """
    w1, b1, w2, b2, w3, b3 = params
    B, S = x.shape
    H1 = w1.shape[1]
    H2 = w2.shape[1]
    A = w3.shape[1]

    # Pack the three biases into one (3, Hmax) buffer -> one DMA instead of three.
    Hmax = max(H1, H2, A)
    bias = jnp.stack([
        jnp.pad(b1.astype(jnp.float32), (0, Hmax - H1)),
        jnp.pad(b2.astype(jnp.float32), (0, Hmax - H2)),
        jnp.pad(b3.astype(jnp.float32), (0, Hmax - A)),
    ])

    use_dropout = training and drop_p > 0.0

    # Grid over the batch dimension; weights/biases resident via constant index_map.
    tb = min(block_b, B)
    grid = (pl.cdiv(B, tb),)
    const = lambda i: (0, 0)
    row = lambda i: (i, 0)

    in_specs = [
        pl.BlockSpec((tb, S), row),       # x  (streams per grid step)
        pl.BlockSpec((S, H1), const),     # W1 (resident)
        pl.BlockSpec((H1, H2), const),    # W2 (resident)
        pl.BlockSpec((H2, A), const),     # W3 (resident)
        pl.BlockSpec((3, Hmax), const),   # packed biases (resident)
    ]
    args = [x.astype(jnp.float32), w1, w2, w3, bias]

    if use_dropout:
        if rng is None:
            raise ValueError("training=True with drop_p>0 requires an `rng` key")
        mask = _dropout_mask(rng, (B, H1), drop_p)
        in_specs.append(pl.BlockSpec((tb, H1), row))
        args.append(mask)

    kernel = functools.partial(_policy_kernel, h1_size=H1, h2_size=H2, a_size=A)

    return pl.pallas_call(
        kernel,
        out_shape=jax.ShapeDtypeStruct((B, A), jnp.float32),
        grid=grid,
        in_specs=in_specs,
        out_specs=pl.BlockSpec((tb, A), row),
        compiler_params=pltpu.CompilerParams(
            dimension_semantics=("parallel",)),   # v7x: shard batch grid over 2 TCs
    )(*args)


def init_policy_params(key, state_size, action_size, h1_size=64, h2_size=64):
    """Deterministic init matching PyTorch Linear's U(-1/sqrt(fan_in), 1/sqrt(fan_in))."""
    def linear(k, fan_in, fan_out):
        kw, kb = jax.random.split(k)
        bound = 1.0 / jnp.sqrt(jnp.float32(fan_in))
        w = jax.random.uniform(kw, (fan_in, fan_out), jnp.float32, -bound, bound)
        b = jax.random.uniform(kb, (fan_out,), jnp.float32, -bound, bound)
        return w, b

    k1, k2, k3 = jax.random.split(key, 3)
    w1, b1 = linear(k1, state_size, h1_size)
    w2, b2 = linear(k2, h1_size, h2_size)
    w3, b3 = linear(k3, h2_size, action_size)
    return (w1, b1, w2, b2, w3, b3)


def policy_reference(params, x, dropout_mask=None):
    """Pure-JAX reference of the forward pass (dropout_mask=None => eval mode)."""
    w1, b1, w2, b2, w3, b3 = params
    h1 = x @ w1 + b1
    if dropout_mask is not None:
        h1 = h1 * dropout_mask
    h1 = jnp.maximum(h1, 0.0)
    h2 = jnp.maximum(h1 @ w2 + b2, 0.0)
    return jax.nn.softmax(h2 @ w3 + b3, axis=1)


if __name__ == "__main__":
    B, STATE, ACTIONS = 8, 16, 6

    key = jax.random.PRNGKey(0)
    kp, kx, kd = jax.random.split(key, 3)
    params = init_policy_params(kp, STATE, ACTIONS, h1_size=64, h2_size=64)
    x = jax.random.normal(kx, (B, STATE), dtype=jnp.float32)

    # Eval-mode forward (dropout disabled) -- checked against the pure-JAX reference.
    out = policy_forward(params, x, training=False)
    out = jax.block_until_ready(out)
    ref = policy_reference(params, x)
    assert out.shape == (B, ACTIONS)
    assert jnp.allclose(jnp.sum(out, axis=1), 1.0, atol=1e-5)
    assert jnp.allclose(out, ref, atol=1e-5, rtol=1e-5)

    # Training-mode forward (dropout p=0.6) -- mask is deterministic given the key,
    # so it can be checked against the reference with the identical mask.
    out_train = policy_forward(params, x, training=True, drop_p=0.6, rng=kd)
    out_train = jax.block_until_ready(out_train)
    mask = _dropout_mask(kd, (B, 64), 0.6)
    ref_train = policy_reference(params, x, dropout_mask=mask)
    assert out_train.shape == (B, ACTIONS)
    assert jnp.allclose(jnp.sum(out_train, axis=1), 1.0, atol=1e-5)
    assert jnp.allclose(out_train, ref_train, atol=1e-5, rtol=1e-5)

    print("KERNEL_OK")
</pallas_src>

<mosaic_0001>
module attributes {stable_mosaic.version = 11 : i64} {
  func.func @_policy_kernel(%arg0: i32, %arg1: memref<8x16xf32, #tpu.memory_space<vmem>>, %arg2: memref<16x64xf32, #tpu.memory_space<vmem>>, %arg3: memref<64x64xf32, #tpu.memory_space<vmem>>, %arg4: memref<64x6xf32, #tpu.memory_space<vmem>>, %arg5: memref<3x64xf32, #tpu.memory_space<vmem>>, %arg6: memref<8x6xf32, #tpu.memory_space<vmem>>) attributes {dimension_semantics = [#tpu.dimension_semantics<parallel>], iteration_bounds = array<i64: 1>, scalar_prefetch = 0 : i64, scratch_operands = 0 : i64, tpu.core_type = #tpu.core_type<tc>, window_params = [{transform_indices = @transform_0, window_bounds = array<i64: 8, 16>}, {pipeline_mode = #tpu.pipeline_mode<synchronous>, transform_indices = @transform_1, window_bounds = array<i64: 16, 64>}, {pipeline_mode = #tpu.pipeline_mode<synchronous>, transform_indices = @transform_2, window_bounds = array<i64: 64, 64>}, {pipeline_mode = #tpu.pipeline_mode<synchronous>, transform_indices = @transform_3, window_bounds = array<i64: 64, 6>}, {pipeline_mode = #tpu.pipeline_mode<synchronous>, transform_indices = @transform_4, window_bounds = array<i64: 3, 64>}, {transform_indices = @transform_5, window_bounds = array<i64: 8, 6>}]} {
    %c0 = arith.constant 0 : index
    %c0_0 = arith.constant 0 : index
    %0 = vector.load %arg1[%c0, %c0_0] : memref<8x16xf32, #tpu.memory_space<vmem>>, vector<8x16xf32>
    %c0_1 = arith.constant 0 : index
    %c0_2 = arith.constant 0 : index
    %1 = vector.load %arg5[%c0_1, %c0_2] : memref<3x64xf32, #tpu.memory_space<vmem>>, vector<1x64xf32>
    %c1 = arith.constant 1 : index
    %c0_3 = arith.constant 0 : index
    %2 = vector.load %arg5[%c1, %c0_3] : memref<3x64xf32, #tpu.memory_space<vmem>>, vector<1x64xf32>
    %c2 = arith.constant 2 : index
    %c0_4 = arith.constant 0 : index
    %3 = vector.load %arg5[%c2, %c0_4] : memref<3x64xf32, #tpu.memory_space<vmem>>, vector<1x6xf32>
    %c0_5 = arith.constant 0 : index
    %c0_6 = arith.constant 0 : index
    %4 = vector.load %arg2[%c0_5, %c0_6] : memref<16x64xf32, #tpu.memory_space<vmem>>, vector<16x64xf32>
    %cst = arith.constant dense<0.000000e+00> : vector<8x64xf32>
    %5 = tpu.matmul %0, %4, %cst {dimension_numbers = #tpu.dot_dimension_numbers<[1], [0], [0], [1], [0, 0, 1, 1], [], []>} : vector<8x16xf32>, vector<16x64xf32>, vector<8x64xf32> -> vector<8x64xf32>
    %6 = vector.broadcast %1 : vector<1x64xf32> to vector<8x64xf32>
    %7 = arith.addf %5, %6 : vector<8x64xf32>
    %cst_7 = arith.constant 0.000000e+00 : f32
    %8 = vector.broadcast %cst_7 : f32 to vector<8x64xf32>
    %9 = arith.maximumf %7, %8 : vector<8x64xf32>
    %c0_8 = arith.constant 0 : index
    %c0_9 = arith.constant 0 : index
    %10 = vector.load %arg3[%c0_8, %c0_9] : memref<64x64xf32, #tpu.memory_space<vmem>>, vector<64x64xf32>
    %cst_10 = arith.constant dense<0.000000e+00> : vector<8x64xf32>
    %11 = tpu.matmul %9, %10, %cst_10 {dimension_numbers = #tpu.dot_dimension_numbers<[1], [0], [0], [1], [0, 0, 1, 1], [], []>} : vector<8x64xf32>, vector<64x64xf32>, vector<8x64xf32> -> vector<8x64xf32>
    %12 = vector.broadcast %2 : vector<1x64xf32> to vector<8x64xf32>
    %13 = arith.addf %11, %12 : vector<8x64xf32>
    %cst_11 = arith.constant 0.000000e+00 : f32
    %14 = vector.broadcast %cst_11 : f32 to vector<8x64xf32>
    %15 = arith.maximumf %13, %14 : vector<8x64xf32>
    %c0_12 = arith.constant 0 : index
    %c0_13 = arith.constant 0 : index
    %16 = vector.load %arg4[%c0_12, %c0_13] : memref<64x6xf32, #tpu.memory_space<vmem>>, vector<64x6xf32>
    %cst_14 = arith.constant dense<0.000000e+00> : vector<8x6xf32>
    %17 = tpu.matmul %15, %16, %cst_14 {dimension_numbers = #tpu.dot_dimension_numbers<[1], [0], [0], [1], [0, 0, 1, 1], [], []>} : vector<8x64xf32>, vector<64x6xf32>, vector<8x6xf32> -> vector<8x6xf32>
    %18 = vector.broadcast %3 : vector<1x6xf32> to vector<8x6xf32>
    %19 = arith.addf %17, %18 : vector<8x6xf32>
    %cst_15 = arith.constant dense<0xFF800000> : vector<8xf32>
    %20 = vector.multi_reduction <maximumf>, %19, %cst_15 [1] : vector<8x6xf32> to vector<8xf32>
    %21 = vector.shape_cast %20 : vector<8xf32> to vector<8x1xf32>
    %22 = vector.broadcast %21 : vector<8x1xf32> to vector<8x6xf32>
    %23 = arith.subf %19, %22 : vector<8x6xf32>
    %24 = math.exp %23 : vector<8x6xf32>
    %cst_16 = arith.constant dense<0.000000e+00> : vector<8xf32>
    %25 = vector.multi_reduction <add>, %24, %cst_16 [1] : vector<8x6xf32> to vector<8xf32>
    %26 = vector.shape_cast %25 : vector<8xf32> to vector<8x1xf32>
    %cst_17 = arith.constant 1.000000e+00 : f32
    %27 = vector.broadcast %cst_17 : f32 to vector<8x1xf32>
    %28 = arith.divf %27, %26 : vector<8x1xf32>
    %29 = vector.broadcast %28 : vector<8x1xf32> to vector<8x6xf32>
    %30 = arith.mulf %24, %29 : vector<8x6xf32>
    %c0_18 = arith.constant 0 : index
    %c0_19 = arith.constant 0 : index
    %31 = vector.load %arg6[%c0_18, %c0_19] : memref<8x6xf32, #tpu.memory_space<vmem>>, vector<8x6xf32>
    tpu.vector_store %arg6[%c0_18, %c0_19], %30 {strides = array<i32>} : memref<8x6xf32, #tpu.memory_space<vmem>>, vector<8x6xf32>,
    return
  }
  func.func @transform_0(%arg0: i32) -> (i32, i32) {
    %c0_i32 = arith.constant 0 : i32
    %c0_i32_0 = arith.constant 0 : i32
    return %arg0, %c0_i32 : i32, i32
  }
  func.func @transform_1(%arg0: i32) -> (i32, i32) {
    %c0_i32 = arith.constant 0 : i32
    %c0_i32_0 = arith.constant 0 : i32
    %c0_i32_1 = arith.constant 0 : i32
    return %c0_i32, %c0_i32_0 : i32, i32
  }
  func.func @transform_2(%arg0: i32) -> (i32, i32) {
    %c0_i32 = arith.constant 0 : i32
    %c0_i32_0 = arith.constant 0 : i32
    %c0_i32_1 = arith.constant 0 : i32
    return %c0_i32, %c0_i32_0 : i32, i32
  }
  func.func @transform_3(%arg0: i32) -> (i32, i32) {
    %c0_i32 = arith.constant 0 : i32
    %c0_i32_0 = arith.constant 0 : i32
    %c0_i32_1 = arith.constant 0 : i32
    return %c0_i32, %c0_i32_0 : i32, i32
  }
  func.func @transform_4(%arg0: i32) -> (i32, i32) {
    %c0_i32 = arith.constant 0 : i32
    %c0_i32_0 = arith.constant 0 : i32
    %c0_i32_1 = arith.constant 0 : i32
    return %c0_i32, %c0_i32_0 : i32, i32
  }
  func.func @transform_5(%arg0: i32) -> (i32, i32) {
    %c0_i32 = arith.constant 0 : i32
    %c0_i32_0 = arith.constant 0 : i32
    return %arg0, %c0_i32 : i32, i32
  }
}

</mosaic_0001>

<llo_original>
// kernel: tpu_custom_call.1
$region0: #{tpu_custom_call.1}
  #allocation0 [shape = 'u32[]', space=smem, size = 0x4, offset = 0x4, fixed_abs, tag = 'smem constant byte address 0x4 - core index']
  #allocation1 [shape = 'u32[144,128]{1,0:T(1,128)}', space=vmem, size = 0x12000, scoped, tag = 'internal scratch']
  %s0 = inlined_call_operand.vmem [shape: f32[8,16], index: 0, kind: input, shape index: {}]
  %s1 = inlined_call_operand.hbm [shape: f32[16,64], index: 1, kind: input, shape index: {}]
  %s2 = inlined_call_operand.vmem [shape: f32[64,64], index: 2, kind: input, shape index: {}]
  %s3 = inlined_call_operand.vmem [shape: f32[64,6], index: 3, kind: input, shape index: {}]
  %s4 = inlined_call_operand.vmem [shape: f32[3,64], index: 4, kind: input, shape index: {}]
  %s5 = inlined_call_operand.hbm [shape: f32[8,6], index: 5, kind: output, shape index: {}]
  %s6 = sld [smem:[#allocation0]]
  $region34: #{tpu_custom_call.1} parent=0
    _
  %s8 = ssub.s32 1, %s6
  %s9 = scalar_select 0, %s8, %s6
  $region1: #{tpu_custom_call.1} parent=0
    #allocation2 [shape = 'u8[8192]{0}', space=vmem, size = 0x2000, scoped, tag = 'input window, operand 1, single buffered']
    #allocation3 [shape = 's32[1]{0}', space=sflag, size = 0x4, scoped, tag = 'scoped memory for tpu_custom_call.1']
    #allocation4 [shape = 's32[1]{0}', space=sflag, size = 0x4, scoped, tag = 'scoped memory for tpu_custom_call.1']
    #allocation5 [shape = 'u8[4096]{0}', space=vmem, size = 0x1000, scoped, tag = 'output window, operand 0, single buffered']
    %10 = vsyncpa [#allocation3], 0
    %11 = vsyncpa [#allocation4], 0
    // Predicated region
    $region2: #{tpu_custom_call.1} parent=1 // pred_check
      _
    $region3: #{tpu_custom_call.1} parent=1 // pred_check_branch
      %13 = sbr.rel (0) target = $region5
    $region4: #{tpu_custom_call.1} parent=1 // pred_region
      _
    $region5: #{tpu_custom_call.1} parent=1 // pred_fallthru
      _
    // Predicated region
    $region6: #{tpu_custom_call.1} parent=1 // pred_check
      _
    $region7: #{tpu_custom_call.1} parent=1 // pred_check_branch
      %15 = sbr.rel (0) target = $region9
    $region8: #{tpu_custom_call.1} parent=1 // pred_region
      %s17 = ssub.s32 256, 256
      %18 = vsyncadd [#allocation3], %s17
      %s19 = sshll.u32 [#allocation2], 4
      %s20 = int_to_ptr.vmem [resolvable:$true] %s19
      %25 = dma.hbm_to_vmem [thread:$0]  %s1, 256, %s20, [#allocation3], 128, 128, 8
    $region9: #{tpu_custom_call.1} parent=1 // pred_fallthru
      _
    // Predicated region
    $region10: #{tpu_custom_call.1} parent=1 // pred_check
      _
    $region11: #{tpu_custom_call.1} parent=1 // pred_check_branch
      %27 = sbr.rel (0) target = $region13
    $region12: #{tpu_custom_call.1} parent=1 // pred_region
      _
    $region13: #{tpu_custom_call.1} parent=1 // pred_fallthru
      _
    // Predicated region
    $region14: #{tpu_custom_call.1} parent=1 // pred_check
      _
    $region15: #{tpu_custom_call.1} parent=1 // pred_check_branch
      %29 = sbr.rel (0) target = $region17
    $region16: #{tpu_custom_call.1} parent=1 // pred_region
      _
    $region17: #{tpu_custom_call.1} parent=1 // pred_fallthru
      _
    // Predicated region
    $region18: #{tpu_custom_call.1} parent=1 // pred_check
      _
    $region19: #{tpu_custom_call.1} parent=1 // pred_check_branch
      %31 = sbr.rel (0) target = $region21
    $region20: #{tpu_custom_call.1} parent=1 // pred_region
      _
    $region21: #{tpu_custom_call.1} parent=1 // pred_fallthru
      _
    // Predicated region
    $region22: #{tpu_custom_call.1} parent=1 // pred_check
      _
    $region23: #{tpu_custom_call.1} parent=1 // pred_check_branch
      %33 = sbr.rel (0) target = $region25
    $region24: #{tpu_custom_call.1} parent=1 // pred_region
      %34 = dma.done [#allocation3], 256
    $region25: #{tpu_custom_call.1} parent=1 // pred_fallthru
      _
    %v35 = vld [vmem:[%s0] sm:$0xff]
    %v36 = vld [vmem:[%s4] sm:$0x1]
    %v37 = vld [vmem:[%s4 + $0x1] sm:$0x1]
    %v38 = vld [vmem:[%s4 + $0x2] sm:$0x1]
    %v39 = vld [vmem:[#allocation2] sm:$0xff]
    %v40 = vld [vmem:[#allocation2 + $0x8] sm:$0xff]
    %v41 = vlaneseq
    %v42 = vshrl.u32 %v41, 7
    %v43 = vsub.s32 0, %v42
    %v44 = vrot.slane %v36, %v43
    %vm45 = vcmask 130048
    %v47 = vsel %vm45, %v35, 0
    %49 = vmatprep.subr.mxu0 0.0
    %50 = vmatpush1.msra.mxu0 0.0
    %51 = vmatprep.subr.mxu0 0.0
    %52 = vmatpush1.msra.mxu0 0.0
    %53 = vmatprep.subr.mxu0 0.0
    %54 = vmatpush1.msra.mxu0 0.0
    %55 = vmatprep.subr.mxu0 0.0
    %56 = vmatpush1.msra.mxu0 0.0
    %57 = vmatprep.subr.mxu0 0.0
    %58 = vmatpush1.msra.mxu0 0.0
    %59 = vmatprep.subr.mxu0 0.0
    %60 = vmatpush1.msra.mxu0 0.0
    %61 = vmatprep.subr.mxu0 0.0
    %62 = vmatpush1.msra.mxu0 0.0
    %63 = vmatprep.subr.mxu0 0.0
    %64 = vmatpush1.msra.mxu0 0.0
    %65 = vmatprep.subr.mxu0 0.0
    %66 = vmatpush1.msra.mxu0 0.0
    %67 = vmatprep.subr.mxu0 0.0
    %68 = vmatpush1.msra.mxu0 0.0
    %69 = vmatprep.subr.mxu0 0.0
    %70 = vmatpush1.msra.mxu0 0.0
    %71 = vmatprep.subr.mxu0 0.0
    %72 = vmatpush1.msra.mxu0 0.0
    %73 = vmatprep.subr.mxu0 0.0
    %74 = vmatpush1.msra.mxu0 0.0
    %75 = vmatprep.subr.mxu0 0.0
    %76 = vmatpush1.msra.mxu0 0.0
    %77 = vmatprep.subr.mxu0 0.0
    %78 = vmatpush1.msra.mxu0 %v40
    %79 = vmatprep.subr.mxu0 0.0
    %80 = vmatpush1.msra.mxu0 %v39
    %81 = vmatprep.subr.mxu0 0.0
    %82 = vmatpush2.msra.mxu0 0.0
    %83 = vmatprep.subr.mxu0 0.0
    %84 = vmatpush2.msra.mxu0 0.0
    %85 = vmatprep.subr.mxu0 0.0
    %86 = vmatpush2.msra.mxu0 0.0
    %87 = vmatprep.subr.mxu0 0.0
    %88 = vmatpush2.msra.mxu0 0.0
    %89 = vmatprep.subr.mxu0 0.0
    %90 = vmatpush2.msra.mxu0 0.0
    %91 = vmatprep.subr.mxu0 0.0
    %92 = vmatpush2.msra.mxu0 0.0
    %93 = vmatprep.subr.mxu0 0.0
    %94 = vmatpush2.msra.mxu0 0.0
    %95 = vmatprep.subr.mxu0 0.0
    %96 = vmatpush2.msra.mxu0 0.0
    %97 = vmatprep.subr.mxu0 0.0
    %98 = vmatpush2.msra.mxu0 0.0
    %99 = vmatprep.subr.mxu0 0.0
    %100 = vmatpush2.msra.mxu0 0.0
    %101 = vmatprep.subr.mxu0 0.0
    %102 = vmatpush2.msra.mxu0 0.0
    %103 = vmatprep.subr.mxu0 0.0
    %104 = vmatpush2.msra.mxu0 0.0
    %105 = vmatprep.subr.mxu0 0.0
    %106 = vmatpush2.msra.mxu0 0.0
    %107 = vmatprep.subr.mxu0 0.0
    %108 = vmatpush2.msra.mxu0 0.0
    %109 = vmatprep.subr.mxu0 0.0
    %110 = vmatpush2.msra.mxu0 0.0
    %111 = vmatprep.subr.mxu0 0.0
    %112 = vmatpush2.msra.mxu0 0.0
    %113 = vmatprep.mubr.f32.mxu0 0.0
    %114 = vmatmul.mubr.f32.gmra.mxu0 %v47
    %v115 = vpop.f32.mrf.mxu0
    %v116 = vadd.f32 %v44, %v115
    %v117 = vpop.f32.mrf.mxu0
    %118 = vdwg.mxu0
    %v119 = vmax.f32 %v116, 0.0
    %v120 = vld [vmem:[%s2] sm:$0xff]
    %v121 = vld [vmem:[%s2 + $0x8] sm:$0xff]
    %v122 = vld [vmem:[%s2 + $0x10] sm:$0xff]
    %v123 = vld [vmem:[%s2 + $0x18] sm:$0xff]
    %v124 = vld [vmem:[%s2 + $0x20] sm:$0xff]
    %v125 = vld [vmem:[%s2 + $0x28] sm:$0xff]
    %v126 = vld [vmem:[%s2 + $0x30] sm:$0xff]
    %v127 = vld [vmem:[%s2 + $0x38] sm:$0xff]
    %v128 = vlaneseq
    %v129 = vshrl.u32 %v128, 7
    %v130 = vsub.s32 0, %v129
    %v131 = vrot.slane %v37, %v130
    %vm132 = vcmask 523264
    %v134 = vsel %vm132, %v119, 0
    %136 = vmatprep.subr.mxu0 0.0
    %137 = vmatpush1.msra.mxu0 0.0
    %138 = vmatprep.subr.mxu0 0.0
    %139 = vmatpush1.msra.mxu0 0.0
    %140 = vmatprep.subr.mxu0 0.0
    %141 = vmatpush1.msra.mxu0 0.0
    %142 = vmatprep.subr.mxu0 0.0
    %143 = vmatpush1.msra.mxu0 0.0
    %144 = vmatprep.subr.mxu0 0.0
    %145 = vmatpush1.msra.mxu0 0.0
    %146 = vmatprep.subr.mxu0 0.0
    %147 = vmatpush1.msra.mxu0 0.0
    %148 = vmatprep.subr.mxu0 0.0
    %149 = vmatpush1.msra.mxu0 0.0
    %150 = vmatprep.subr.mxu0 0.0
    %151 = vmatpush1.msra.mxu0 0.0
    %152 = vmatprep.subr.mxu0 0.0
    %153 = vmatpush1.msra.mxu0 %v127
    %154 = vmatprep.subr.mxu0 0.0
    %155 = vmatpush1.msra.mxu0 %v126
    %156 = vmatprep.subr.mxu0 0.0
    %157 = vmatpush1.msra.mxu0 %v125
    %158 = vmatprep.subr.mxu0 0.0
    %159 = vmatpush1.msra.mxu0 %v124
    %160 = vmatprep.subr.mxu0 0.0
    %161 = vmatpush1.msra.mxu0 %v123
    %162 = vmatprep.subr.mxu0 0.0
    %163 = vmatpush1.msra.mxu0 %v122
    %164 = vmatprep.subr.mxu0 0.0
    %165 = vmatpush1.msra.mxu0 %v121
    %166 = vmatprep.subr.mxu0 0.0
    %167 = vmatpush1.msra.mxu0 %v120
    %168 = vmatprep.subr.mxu0 0.0
    %169 = vmatpush2.msra.mxu0 0.0
    %170 = vmatprep.subr.mxu0 0.0
    %171 = vmatpush2.msra.mxu0 0.0
    %172 = vmatprep.subr.mxu0 0.0
    %173 = vmatpush2.msra.mxu0 0.0
    %174 = vmatprep.subr.mxu0 0.0
    %175 = vmatpush2.msra.mxu0 0.0
    %176 = vmatprep.subr.mxu0 0.0
    %177 = vmatpush2.msra.mxu0 0.0
    %178 = vmatprep.subr.mxu0 0.0
    %179 = vmatpush2.msra.mxu0 0.0
    %180 = vmatprep.subr.mxu0 0.0
    %181 = vmatpush2.msra.mxu0 0.0
    %182 = vmatprep.subr.mxu0 0.0
    %183 = vmatpush2.msra.mxu0 0.0
    %184 = vmatprep.subr.mxu0 0.0
    %185 = vmatpush2.msra.mxu0 0.0
    %186 = vmatprep.subr.mxu0 0.0
    %187 = vmatpush2.msra.mxu0 0.0
    %188 = vmatprep.subr.mxu0 0.0
    %189 = vmatpush2.msra.mxu0 0.0
    %190 = vmatprep.subr.mxu0 0.0
    %191 = vmatpush2.msra.mxu0 0.0
    %192 = vmatprep.subr.mxu0 0.0
    %193 = vmatpush2.msra.mxu0 0.0
    %194 = vmatprep.subr.mxu0 0.0
    %195 = vmatpush2.msra.mxu0 0.0
    %196 = vmatprep.subr.mxu0 0.0
    %197 = vmatpush2.msra.mxu0 0.0
    %198 = vmatprep.subr.mxu0 0.0
    %199 = vmatpush2.msra.mxu0 0.0
    %200 = vmatprep.mubr.f32.mxu0 0.0
    %201 = vmatmul.mubr.f32.gmra.mxu0 %v134
    %v202 = vpop.f32.mrf.mxu0
    %v203 = vadd.f32 %v131, %v202
    %v204 = vpop.f32.mrf.mxu0
    %205 = vdwg.mxu0
    %v206 = vmax.f32 %v203, 0.0
    %v207 = vld [vmem:[%s3] sm:$0xff]
    %v208 = vld [vmem:[%s3 + $0x8] sm:$0xff]
    %v209 = vld [vmem:[%s3 + $0x10] sm:$0xff]
    %v210 = vld [vmem:[%s3 + $0x18] sm:$0xff]
    %v211 = vld [vmem:[%s3 + $0x20] sm:$0xff]
    %v212 = vld [vmem:[%s3 + $0x28] sm:$0xff]
    %v213 = vld [vmem:[%s3 + $0x30] sm:$0xff]
    %v214 = vld [vmem:[%s3 + $0x38] sm:$0xff]
    %v215 = vlaneseq
    %v216 = vshrl.u32 %v215, 7
    %v217 = vsub.s32 0, %v216
    %v218 = vrot.slane %v38, %v217
    %v220 = vsel %vm132, %v206, 0
    %222 = vmatprep.subr.mxu0 0.0
    %223 = vmatpush1.msra.mxu0 0.0
    %224 = vmatprep.subr.mxu0 0.0
    %225 = vmatpush1.msra.mxu0 0.0
    %226 = vmatprep.subr.mxu0 0.0
    %227 = vmatpush1.msra.mxu0 0.0
    %228 = vmatprep.subr.mxu0 0.0
    %229 = vmatpush1.msra.mxu0 0.0
    %230 = vmatprep.subr.mxu0 0.0
    %231 = vmatpush1.msra.mxu0 0.0
    %232 = vmatprep.subr.mxu0 0.0
    %233 = vmatpush1.msra.mxu0 0.0
    %234 = vmatprep.subr.mxu0 0.0
    %235 = vmatpush1.msra.mxu0 0.0
    %236 = vmatprep.subr.mxu0 0.0
    %237 = vmatpush1.msra.mxu0 0.0
    %238 = vmatprep.subr.mxu0 0.0
    %239 = vmatpush1.msra.mxu0 %v214
    %240 = vmatprep.subr.mxu0 0.0
    %241 = vmatpush1.msra.mxu0 %v213
    %242 = vmatprep.subr.mxu0 0.0
    %243 = vmatpush1.msra.mxu0 %v212
    %244 = vmatprep.subr.mxu0 0.0
    %245 = vmatpush1.msra.mxu0 %v211
    %246 = vmatprep.subr.mxu0 0.0
    %247 = vmatpush1.msra.mxu0 %v210
    %248 = vmatprep.subr.mxu0 0.0
    %249 = vmatpush1.msra.mxu0 %v209
    %250 = vmatprep.subr.mxu0 0.0
    %251 = vmatpush1.msra.mxu0 %v208
    %252 = vmatprep.subr.mxu0 0.0
    %253 = vmatpush1.msra.mxu0 %v207
    %254 = vmatprep.subr.mxu0 0.0
    %255 = vmatpush2.msra.mxu0 0.0
    %256 = vmatprep.subr.mxu0 0.0
    %257 = vmatpush2.msra.mxu0 0.0
    %258 = vmatprep.subr.mxu0 0.0
    %259 = vmatpush2.msra.mxu0 0.0
    %260 = vmatprep.subr.mxu0 0.0
    %261 = vmatpush2.msra.mxu0 0.0
    %262 = vmatprep.subr.mxu0 0.0
    %263 = vmatpush2.msra.mxu0 0.0
    %264 = vmatprep.subr.mxu0 0.0
    %265 = vmatpush2.msra.mxu0 0.0
    %266 = vmatprep.subr.mxu0 0.0
    %267 = vmatpush2.msra.mxu0 0.0
    %268 = vmatprep.subr.mxu0 0.0
    %269 = vmatpush2.msra.mxu0 0.0
    %270 = vmatprep.subr.mxu0 0.0
    %271 = vmatpush2.msra.mxu0 0.0
    %272 = vmatprep.subr.mxu0 0.0
    %273 = vmatpush2.msra.mxu0 0.0
    %274 = vmatprep.subr.mxu0 0.0
    %275 = vmatpush2.msra.mxu0 0.0
    %276 = vmatprep.subr.mxu0 0.0
    %277 = vmatpush2.msra.mxu0 0.0
    %278 = vmatprep.subr.mxu0 0.0
    %279 = vmatpush2.msra.mxu0 0.0
    %280 = vmatprep.subr.mxu0 0.0
    %281 = vmatpush2.msra.mxu0 0.0
    %282 = vmatprep.subr.mxu0 0.0
    %283 = vmatpush2.msra.mxu0 0.0
    %284 = vmatprep.subr.mxu0 0.0
    %285 = vmatpush2.msra.mxu0 0.0
    %286 = vmatprep.mubr.f32.mxu0 0.0
    %287 = vmatmul.mubr.f32.gmra.mxu0 %v220
    %v288 = vpop.f32.mrf.mxu0
    %v289 = vadd.f32 %v218, %v288
    %v290 = vpop.f32.mrf.mxu0
    %291 = vdwg.mxu0
    %vm292 = vcmask 48128
    %v293 = vsel %vm292, %v289, -inf
    %294 = vmax.xlane.f32.xlu0 %v293
    %v295 = vpop.xlane.xlu0 %294
    %v296 = vsub.f32 %v289, %v295
    %v297 = vmul.f32 %v296, 1.442695
    %v298 = vpow.pop %v297
    %v299 = vsel %vm292, %v298, 0.0
    %300 = vadd.xlane.f32.xlu0 %v299
    %v301 = vpop.xlane.xlu0 %300
    %v302 = vrcp.pop %v301
    %v303 = vmul.f32 1.0, %v302
    %v304 = vmul.f32 %v298, %v303
    %305 = vst.msk [vmem:[#allocation5] sm:$0xff] %vm292, %v304
    // Predicated region
    $region26: #{tpu_custom_call.1} parent=1 // pred_check
      _
    $region27: #{tpu_custom_call.1} parent=1 // pred_check_branch
      %307 = sbr.rel (0) target = $region29
    $region28: #{tpu_custom_call.1} parent=1 // pred_region
      %s309 = ssub.s32 128, 128
      %310 = vsyncadd [#allocation4], %s309
      %s312 = sshll.u32 [#allocation5], 4
      %s313 = int_to_ptr.vmem [resolvable:$true] %s312
      %315 = dma.vmem_to_hbm [thread:$0]  %s313, 128, %s5, [#allocation4]
    $region29: #{tpu_custom_call.1} parent=1 // pred_fallthru
      _
    // Predicated region
    $region30: #{tpu_custom_call.1} parent=1 // pred_check
      _
    $region31: #{tpu_custom_call.1} parent=1 // pred_check_branch
      %317 = sbr.rel (0) target = $region33
    $region32: #{tpu_custom_call.1} parent=1 // pred_region
      %318 = dma.done [#allocation4], 128
    $region33: #{tpu_custom_call.1} parent=1 // pred_fallthru
      _
    %319 = vsyncpa [#allocation3], 1
    %320 = vsyncpa [#allocation4], 1

</llo_original>
